<compile_context>
chip_gen: v5e
topology: v5e:2x2
jax: 0.10.0
libtpu: 0.0.40
codegen_flags: <defaults>
</compile_context>

<pallas_src>
import functools

import jax
import jax.numpy as jnp
from jax.experimental import pallas as pl
from jax.experimental.pallas import tpu as pltpu

_LANE = 128
_SUBLANE = 8


def _round_up(n, m):
    return ((n + m - 1) // m) * m


@functools.lru_cache(maxsize=1)
def _device_kind():
    try:
        return jax.devices()[0].device_kind.lower()
    except Exception:
        return ""


def _default_block_rows():
    # v5e: 4x(128x128) MXU + single vst slot -> tm=128 keeps the MXU full with
    # half the f32 intermediate footprint.  v6e/v7x (256-deep MXU) -> 256.
    return 128 if "v5" in _device_kind() else 256


def _vmem_cap_bytes():
    # Per-TensorCore physical VMEM: 64 MiB on v7x, 128 MiB on v5e/v6e.
    return (64 << 20) if "7" in _device_kind() else (128 << 20)


def _resblock_skip_kernel(x_ref, w1s_ref, b1s_ref, w2_ref, o_ref, *, f_out_p):
    """relu( fc2(relu(fc1(x))) + skip(x) ); fc1 || skip fused into one matmul.

    b2 is pre-folded into the skip half of b1s, so the skip projection is used
    directly as the accumulator."""
    x = x_ref[...]                                   # already mm_dtype (wrapper cast)
    # One full-lane MXU pass: hr = x @ [w1 | ws] + [b1 | bs+b2] -> (tm, 2*f_out_p) f32
    hr = jnp.dot(x, w1s_ref[...], preferred_element_type=jnp.float32) + b1s_ref[...]
    h = jnp.maximum(hr[:, :f_out_p], 0.0)            # fc1 activation (f32)
    acc = hr[:, f_out_p:]                            # skip proj (+b2) -> accumulator
    acc = acc + jnp.dot(h.astype(w2_ref.dtype), w2_ref[...],
                        preferred_element_type=jnp.float32)
    o_ref[...] = jnp.maximum(acc, 0.0).astype(o_ref.dtype)


def _resblock_identity_kernel(x_ref, w1_ref, b1_ref, w2_ref, b2_ref, o_ref):
    """relu( fc2(relu(fc1(x))) + x )   (in_features == out_features)."""
    x = x_ref[...]                                   # already mm_dtype
    h = jnp.maximum(
        jnp.dot(x, w1_ref[...], preferred_element_type=jnp.float32) + b1_ref[...],
        0.0)
    acc = x.astype(jnp.float32) + b2_ref[...]        # identity residual -> accumulator
    acc = acc + jnp.dot(h.astype(w2_ref.dtype), w2_ref[...],
                        preferred_element_type=jnp.float32)
    o_ref[...] = jnp.maximum(acc, 0.0).astype(o_ref.dtype)


@functools.partial(jax.jit,
                   static_argnames=("block_rows", "matmul_dtype", "vmem_cap"))
def _residual_block_impl(x, params, block_rows, matmul_dtype, vmem_cap):
    B, f_in = x.shape
    f_out = params["w1"].shape[1]
    has_skip = "ws" in params
    out_dtype = x.dtype
    mm_dtype = jnp.dtype(out_dtype if matmul_dtype is None else matmul_dtype)

    # ---------- static tiling / footprint planning (trace-time Python) ----------
    f_out_p = _round_up(f_out, _LANE)
    # Lane/K-dense contraction dim (identity path needs f_in padded like f_out
    # anyway for the residual add; skip path pads K to a 128 multiple).
    f_in_p = f_out_p if not has_skip else _round_up(f_in, _LANE)

    tm = min(block_rows, _round_up(B, _SUBLANE))
    # Megacore: ensure >= 2 grid steps when the batch allows it so v7x's second
    # TensorCore gets work and row DMA of step i+1 overlaps compute of step i.
    if _round_up(B, tm) // tm <= 1 and tm >= 2 * _SUBLANE:
        tm = _round_up((tm + 1) // 2, _SUBLANE)
    B_p = _round_up(B, tm)

    mm_isz = jnp.dtype(mm_dtype).itemsize
    out_isz = jnp.dtype(out_dtype).itemsize
    n_fused = 2 * f_out_p if has_skip else f_out_p
    weight_bytes = ((f_in_p * n_fused + f_out_p * f_out_p) * mm_isz
                    + (n_fused + f_out_p) * 4)                 # biases (f32)
    stream_bytes = 2 * tm * (f_in_p * mm_isz + f_out_p * out_isz)  # 2x-buffered rows
    scratch_bytes = tm * 2 * f_out_p * 4                       # f32 hr / (h, acc)
    single_buffer_weights = 2 * weight_bytes > (8 << 20)
    resident = ((1 if single_buffer_weights else 2) * weight_bytes
                + stream_bytes + scratch_bytes)

    if resident > int(0.9 * vmem_cap):
        # TODO(synk): K/N-tiled Pallas path (extra "arbitrary" grid axes, f32
        # VMEM accumulator, pl.when init/finalize) for weights that do not fit
        # per-TC VMEM (mostly v7x at 64 MiB); fall back to XLA meanwhile.
        h = jnp.maximum(x @ params["w1"] + params["b1"], 0.0)
        out = h @ params["w2"] + params["b2"]
        res = x @ params["ws"] + params["bs"] if has_skip else x
        return jnp.maximum(out + res, 0.0)

    vmem_limit = int(min(vmem_cap, max(32 << 20, int(resident * 1.25))))

    def pad2(a, rows, cols):
        return jnp.pad(a, ((0, rows - a.shape[0]), (0, cols - a.shape[1])))

    w2 = pad2(params["w2"], f_out_p, f_out_p).astype(mm_dtype)

    if has_skip:
        # Fuse fc1 and the skip projection into one lane-dense weight slab and
        # fold fc2's bias into the skip half's bias.
        w1s = jnp.concatenate([pad2(params["w1"], f_in_p, f_out_p),
                               pad2(params["ws"], f_in_p, f_out_p)],
                              axis=1).astype(mm_dtype)
        b1s = jnp.concatenate([pad2(params["b1"], 1, f_out_p),
                               pad2(params["bs"] + params["b2"], 1, f_out_p)],
                              axis=1).astype(jnp.float32)
        weight_args = (w1s, b1s, w2)
        kernel = functools.partial(_resblock_skip_kernel, f_out_p=f_out_p)
        flops = 2 * B_p * f_in_p * (2 * f_out_p) + 2 * B_p * f_out_p * f_out_p
    else:
        w1 = pad2(params["w1"], f_out_p, f_out_p).astype(mm_dtype)
        b1 = pad2(params["b1"], 1, f_out_p).astype(jnp.float32)
        b2 = pad2(params["b2"], 1, f_out_p).astype(jnp.float32)
        weight_args = (w1, b1, w2, b2)
        kernel = _resblock_identity_kernel
        flops = 4 * B_p * f_out_p * f_out_p

    # Pad batch rows to the M tile, pad features lane/K-dense, and cast x to the
    # MXU dtype ONCE here (halves x DMA bytes for bf16, no per-step VPU cast).
    x_p = jnp.pad(x, ((0, B_p - B), (0, f_in_p - f_in))).astype(mm_dtype)

    grid = (B_p // tm,)
    # TODO(synk): for memory-bound configs (tiny weights, huge B) sweep
    # pipeline_mode=pl.Buffered(3) on the streaming row specs below.
    row_in = pl.BlockSpec((tm, f_in_p), lambda i: (i, 0))
    row_out = pl.BlockSpec((tm, f_out_p), lambda i: (i, 0))

    def weight_spec(a):
        # Grid-invariant: weights/biases stay resident in VMEM.  Single-buffer
        # them once they are big enough to matter (Pallas double-buffers inputs
        # by default; a never-refilled second copy only wastes VMEM).
        if single_buffer_weights:
            try:
                return pl.BlockSpec(a.shape, lambda i: (0, 0),
                                    pipeline_mode=pl.Buffered(1))
            except (TypeError, AttributeError):
                pass  # older jax without pipeline_mode / Buffered
        return pl.BlockSpec(a.shape, lambda i: (0, 0))

    bytes_accessed = (x_p.size * mm_isz
                      + sum(a.size * a.dtype.itemsize for a in weight_args)
                      + B_p * f_out_p * out_isz)

    out = pl.pallas_call(
        kernel,
        out_shape=jax.ShapeDtypeStruct((B_p, f_out_p), out_dtype),
        grid_spec=pltpu.PrefetchScalarGridSpec(
            num_scalar_prefetch=0,
            grid=grid,
            in_specs=[row_in] + [weight_spec(a) for a in weight_args],
            out_specs=row_out,
        ),
        compiler_params=pltpu.CompilerParams(
            dimension_semantics=("parallel",),
            vmem_limit_bytes=vmem_limit),
        cost_estimate=pl.CostEstimate(
            flops=flops, transcendentals=0, bytes_accessed=bytes_accessed),
    )(x_p, *weight_args)

    return out[:B, :f_out]


def residual_block(x, params, block_rows=None, matmul_dtype=jnp.bfloat16):
    """Forward pass of ResidualBlock.

    x: [B, in_features] float32
    params: dict with w1 [in,out], b1 [1,out], w2 [out,out], b2 [1,out],
            and optionally ws [in,out], bs [1,out] (skip projection).
    block_rows: M tile; default auto-selects 128 on v5e, 256 on v6e/v7x.
    matmul_dtype: MXU dtype (default bf16, f32 accumulation). Pass jnp.float32
                  or None for exact-f32 matmuls.
    """
    if block_rows is None:
        block_rows = _default_block_rows()
    return _residual_block_impl(x, params, block_rows, matmul_dtype,
                                _vmem_cap_bytes())


def init_params(key, in_features, out_features):
    """Parameter init matching the PyTorch module's shapes.

    nn.Linear(in, out).weight is [out, in]; we store it transposed as [in, out].
    Biases are stored as [1, out] for lane-friendly broadcasting in-kernel.
    """
    keys = jax.random.split(key, 6)
    bound1 = 1.0 / jnp.sqrt(in_features)
    bound2 = 1.0 / jnp.sqrt(out_features)
    params = {
        "w1": jax.random.uniform(keys[0], (in_features, out_features),
                                 jnp.float32, -bound1, bound1),
        "b1": jax.random.uniform(keys[1], (1, out_features),
                                 jnp.float32, -bound1, bound1),
        "w2": jax.random.uniform(keys[2], (out_features, out_features),
                                 jnp.float32, -bound2, bound2),
        "b2": jax.random.uniform(keys[3], (1, out_features),
                                 jnp.float32, -bound2, bound2),
    }
    if in_features != out_features:
        params["ws"] = jax.random.uniform(keys[4], (in_features, out_features),
                                          jnp.float32, -bound1, bound1)
        params["bs"] = jax.random.uniform(keys[5], (1, out_features),
                                          jnp.float32, -bound1, bound1)
    return params


def _reference(x, params):
    h = jnp.maximum(x @ params["w1"] + params["b1"], 0.0)
    out = h @ params["w2"] + params["b2"]
    res = x @ params["ws"] + params["bs"] if "ws" in params else x
    return jnp.maximum(out + res, 0.0)


if __name__ == "__main__":
    key = jax.random.PRNGKey(0)
    k_x, k_x2, k_p1, k_p2 = jax.random.split(key, 4)

    batch, in_features, out_features = 8, 32, 64
    x = jax.random.normal(k_x, (batch, in_features), jnp.float32)

    # Case 1: in != out (fused fc1||skip path), default bf16 MXU (f32 accum).
    params = init_params(k_p1, in_features, out_features)
    out_bf16 = jax.block_until_ready(residual_block(x, params))
    ref = _reference(x, params)
    assert out_bf16.shape == (batch, out_features)
    assert jnp.allclose(out_bf16, ref, atol=5e-2, rtol=5e-2)

    # Same case, exact-f32 MXU path: tight tolerance.
    out_f32 = jax.block_until_ready(
        residual_block(x, params, matmul_dtype=jnp.float32))
    assert jnp.allclose(out_f32, ref, atol=1e-4, rtol=1e-4)

    # Case 2: in == out -> identity skip (bf16 default + exact f32).
    params_same = init_params(k_p2, in_features, in_features)
    ref_same = _reference(x, params_same)
    out_same = jax.block_until_ready(residual_block(x, params_same))
    assert out_same.shape == (batch, in_features)
    assert jnp.allclose(out_same, ref_same, atol=5e-2, rtol=5e-2)
    out_same_f32 = jax.block_until_ready(
        residual_block(x, params_same, matmul_dtype=jnp.float32))
    assert jnp.allclose(out_same_f32, ref_same, atol=1e-4, rtol=1e-4)

    # Case 3: ragged batch (13) exercises batch padding + the split-M
    # (two-grid-step) megacore path.
    x_odd = jax.random.normal(k_x2, (13, in_features), jnp.float32)
    ref_odd = _reference(x_odd, params)
    out_odd = jax.block_until_ready(
        residual_block(x_odd, params, matmul_dtype=jnp.float32))
    assert out_odd.shape == (13, out_features)
    assert jnp.allclose(out_odd, ref_odd, atol=1e-4, rtol=1e-4)

    print("KERNEL_OK")
</pallas_src>

<mosaic_0001>
module attributes {stable_mosaic.version = 11 : i64} {
  func.func @_resblock_skip_kernel(%arg0: i32, %arg1: memref<8x128xbf16, #tpu.memory_space<vmem>>, %arg2: memref<128x256xbf16, #tpu.memory_space<vmem>>, %arg3: memref<1x256xf32, #tpu.memory_space<vmem>>, %arg4: memref<128x128xbf16, #tpu.memory_space<vmem>>, %arg5: memref<8x128xf32, #tpu.memory_space<vmem>>) attributes {dimension_semantics = [#tpu.dimension_semantics<parallel>], iteration_bounds = array<i64: 1>, scalar_prefetch = 0 : i64, scratch_operands = 0 : i64, tpu.core_type = #tpu.core_type<tc>, window_params = [{transform_indices = @transform_0, window_bounds = array<i64: 8, 128>}, {pipeline_mode = #tpu.pipeline_mode<synchronous>, transform_indices = @transform_1, window_bounds = array<i64: 128, 256>}, {pipeline_mode = #tpu.pipeline_mode<synchronous>, transform_indices = @transform_2, window_bounds = array<i64: 1, 256>}, {pipeline_mode = #tpu.pipeline_mode<synchronous>, transform_indices = @transform_3, window_bounds = array<i64: 128, 128>}, {transform_indices = @transform_4, window_bounds = array<i64: 8, 128>}]} {
    %c0 = arith.constant 0 : index
    %c0_0 = arith.constant 0 : index
    %0 = vector.load %arg1[%c0, %c0_0] : memref<8x128xbf16, #tpu.memory_space<vmem>>, vector<8x128xbf16>
    %c0_1 = arith.constant 0 : index
    %c0_2 = arith.constant 0 : index
    %1 = vector.load %arg2[%c0_1, %c0_2] : memref<128x256xbf16, #tpu.memory_space<vmem>>, vector<128x256xbf16>
    %cst = arith.constant dense<0.000000e+00> : vector<8x256xf32>
    %2 = tpu.matmul %0, %1, %cst {dimension_numbers = #tpu.dot_dimension_numbers<[1], [0], [0], [1], [0, 0, 1, 1], [], []>} : vector<8x128xbf16>, vector<128x256xbf16>, vector<8x256xf32> -> vector<8x256xf32>
    %c0_3 = arith.constant 0 : index
    %c0_4 = arith.constant 0 : index
    %3 = vector.load %arg3[%c0_3, %c0_4] : memref<1x256xf32, #tpu.memory_space<vmem>>, vector<1x256xf32>
    %4 = vector.broadcast %3 : vector<1x256xf32> to vector<8x256xf32>
    %5 = arith.addf %2, %4 : vector<8x256xf32>
    %6 = vector.extract_strided_slice %5 {offsets = [0, 0], sizes = [8, 128], strides = [1, 1]} : vector<8x256xf32> to vector<8x128xf32>
    %cst_5 = arith.constant 0.000000e+00 : f32
    %7 = vector.broadcast %cst_5 : f32 to vector<8x128xf32>
    %8 = arith.maximumf %6, %7 : vector<8x128xf32>
    %9 = vector.extract_strided_slice %5 {offsets = [0, 128], sizes = [8, 128], strides = [1, 1]} : vector<8x256xf32> to vector<8x128xf32>
    %10 = arith.truncf %8 : vector<8x128xf32> to vector<8x128xbf16>
    %c0_6 = arith.constant 0 : index
    %c0_7 = arith.constant 0 : index
    %11 = vector.load %arg4[%c0_6, %c0_7] : memref<128x128xbf16, #tpu.memory_space<vmem>>, vector<128x128xbf16>
    %cst_8 = arith.constant dense<0.000000e+00> : vector<8x128xf32>
    %12 = tpu.matmul %10, %11, %cst_8 {dimension_numbers = #tpu.dot_dimension_numbers<[1], [0], [0], [1], [0, 0, 1, 1], [], []>} : vector<8x128xbf16>, vector<128x128xbf16>, vector<8x128xf32> -> vector<8x128xf32>
    %13 = arith.addf %9, %12 : vector<8x128xf32>
    %cst_9 = arith.constant 0.000000e+00 : f32
    %14 = vector.broadcast %cst_9 : f32 to vector<8x128xf32>
    %15 = arith.maximumf %13, %14 : vector<8x128xf32>
    %c0_10 = arith.constant 0 : index
    %c0_11 = arith.constant 0 : index
    %16 = vector.load %arg5[%c0_10, %c0_11] : memref<8x128xf32, #tpu.memory_space<vmem>>, vector<8x128xf32>
    tpu.vector_store %arg5[%c0_10, %c0_11], %15 {strides = array<i32>} : memref<8x128xf32, #tpu.memory_space<vmem>>, vector<8x128xf32>,
    return
  }
  func.func @transform_0(%arg0: i32) -> (i32, i32) {
    %c0_i32 = arith.constant 0 : i32
    %c0_i32_0 = arith.constant 0 : i32
    return %arg0, %c0_i32 : i32, i32
  }
  func.func @transform_1(%arg0: i32) -> (i32, i32) {
    %c0_i32 = arith.constant 0 : i32
    %c0_i32_0 = arith.constant 0 : i32
    %c0_i32_1 = arith.constant 0 : i32
    return %c0_i32, %c0_i32_0 : i32, i32
  }
  func.func @transform_2(%arg0: i32) -> (i32, i32) {
    %c0_i32 = arith.constant 0 : i32
    %c0_i32_0 = arith.constant 0 : i32
    %c0_i32_1 = arith.constant 0 : i32
    return %c0_i32, %c0_i32_0 : i32, i32
  }
  func.func @transform_3(%arg0: i32) -> (i32, i32) {
    %c0_i32 = arith.constant 0 : i32
    %c0_i32_0 = arith.constant 0 : i32
    %c0_i32_1 = arith.constant 0 : i32
    return %c0_i32, %c0_i32_0 : i32, i32
  }
  func.func @transform_4(%arg0: i32) -> (i32, i32) {
    %c0_i32 = arith.constant 0 : i32
    %c0_i32_0 = arith.constant 0 : i32
    return %arg0, %c0_i32 : i32, i32
  }
}

</mosaic_0001>

<llo_original>
// kernel: _residual_block_impl.1
$region0: #{_residual_block_impl.1}
  #allocation0 [shape = 'u32[]', space=smem, size = 0x4, offset = 0x4, fixed_abs, tag = 'smem constant byte address 0x4 - core index']
  #allocation1 [shape = 'u32[72,128]{1,0:T(1,128)}', space=vmem, size = 0x9000, scoped, tag = 'internal scratch']
  %s0 = inlined_call_operand.vmem [shape: bf16[8,128], index: 0, kind: input, shape index: {}]
  %s1 = inlined_call_operand.vmem [shape: bf16[128,256], index: 1, kind: input, shape index: {}]
  %s2 = inlined_call_operand.vmem [shape: f32[1,256], index: 2, kind: input, shape index: {}]
  %s3 = inlined_call_operand.vmem [shape: bf16[128,128], index: 3, kind: input, shape index: {}]
  %s4 = inlined_call_operand.hbm [shape: f32[8,128], index: 4, kind: output, shape index: {}]
  %s5 = sld [smem:[#allocation0]]
  $region26: #{_residual_block_impl.1} parent=0
    _
  %s7 = ssub.s32 1, %s5
  %s8 = scalar_select 0, %s7, %s5
  $region1: #{_residual_block_impl.1} parent=0
    #allocation2 [shape = 'u8[4096]{0}', space=vmem, size = 0x1000, scoped, tag = 'output window, operand 0, single buffered']
    #allocation3 [shape = 's32[1]{0}', space=sflag, size = 0x4, scoped, tag = 'scoped memory for _residual_block_impl.1']
    %9 = vsyncpa [#allocation3], 0
    // Predicated region
    $region2: #{_residual_block_impl.1} parent=1 // pred_check
      _
    $region3: #{_residual_block_impl.1} parent=1 // pred_check_branch
      %11 = sbr.rel (0) target = $region5
    $region4: #{_residual_block_impl.1} parent=1 // pred_region
      _
    $region5: #{_residual_block_impl.1} parent=1 // pred_fallthru
      _
    // Predicated region
    $region6: #{_residual_block_impl.1} parent=1 // pred_check
      _
    $region7: #{_residual_block_impl.1} parent=1 // pred_check_branch
      %13 = sbr.rel (0) target = $region9
    $region8: #{_residual_block_impl.1} parent=1 // pred_region
      _
    $region9: #{_residual_block_impl.1} parent=1 // pred_fallthru
      _
    // Predicated region
    $region10: #{_residual_block_impl.1} parent=1 // pred_check
      _
    $region11: #{_residual_block_impl.1} parent=1 // pred_check_branch
      %15 = sbr.rel (0) target = $region13
    $region12: #{_residual_block_impl.1} parent=1 // pred_region
      _
    $region13: #{_residual_block_impl.1} parent=1 // pred_fallthru
      _
    // Predicated region
    $region14: #{_residual_block_impl.1} parent=1 // pred_check
      _
    $region15: #{_residual_block_impl.1} parent=1 // pred_check_branch
      %17 = sbr.rel (0) target = $region17
    $region16: #{_residual_block_impl.1} parent=1 // pred_region
      _
    $region17: #{_residual_block_impl.1} parent=1 // pred_fallthru
      _
    %v18 = vld [vmem:[%s0] sm:$0xf]
    %v19 = vld [vmem:[%s1] sm:$0xff]
    %v20 = vld [vmem:[%s1 + $0x8] sm:$0xff]
    %v21 = vld [vmem:[%s1 + $0x10] sm:$0xff]
    %v22 = vld [vmem:[%s1 + $0x18] sm:$0xff]
    %v23 = vld [vmem:[%s1 + $0x20] sm:$0xff]
    %v24 = vld [vmem:[%s1 + $0x28] sm:$0xff]
    %v25 = vld [vmem:[%s1 + $0x30] sm:$0xff]
    %v26 = vld [vmem:[%s1 + $0x38] sm:$0xff]
    %v27 = vld [vmem:[%s1 + $0x40] sm:$0xff]
    %v28 = vld [vmem:[%s1 + $0x48] sm:$0xff]
    %v29 = vld [vmem:[%s1 + $0x50] sm:$0xff]
    %v30 = vld [vmem:[%s1 + $0x58] sm:$0xff]
    %v31 = vld [vmem:[%s1 + $0x60] sm:$0xff]
    %v32 = vld [vmem:[%s1 + $0x68] sm:$0xff]
    %v33 = vld [vmem:[%s1 + $0x70] sm:$0xff]
    %v34 = vld [vmem:[%s1 + $0x78] sm:$0xff]
    %v35 = vld [vmem:[%s2] sm:$0x3]
    %v37 = vperm.slane %v35, 0
    %v38 = vperm.slane %v35, 1
    %v57 = vunpack.c.l.b16 %v19
    %v58 = vunpack.c.h.b16 %v19
    %v59 = vunpack.c.l.b16 %v20
    %v60 = vunpack.c.h.b16 %v20
    %v61 = vunpack.c.l.b16 %v21
    %v62 = vunpack.c.h.b16 %v21
    %v63 = vunpack.c.l.b16 %v22
    %v64 = vunpack.c.h.b16 %v22
    %v65 = vunpack.c.l.b16 %v23
    %v66 = vunpack.c.h.b16 %v23
    %v67 = vunpack.c.l.b16 %v24
    %v68 = vunpack.c.h.b16 %v24
    %v69 = vunpack.c.l.b16 %v25
    %v70 = vunpack.c.h.b16 %v25
    %v71 = vunpack.c.l.b16 %v26
    %v72 = vunpack.c.h.b16 %v26
    %v73 = vunpack.c.l.b16 %v27
    %v74 = vunpack.c.h.b16 %v27
    %v75 = vunpack.c.l.b16 %v28
    %v76 = vunpack.c.h.b16 %v28
    %v77 = vunpack.c.l.b16 %v29
    %v78 = vunpack.c.h.b16 %v29
    %v79 = vunpack.c.l.b16 %v30
    %v80 = vunpack.c.h.b16 %v30
    %v81 = vunpack.c.l.b16 %v31
    %v82 = vunpack.c.h.b16 %v31
    %v83 = vunpack.c.l.b16 %v32
    %v84 = vunpack.c.h.b16 %v32
    %v85 = vunpack.c.l.b16 %v33
    %v86 = vunpack.c.h.b16 %v33
    %v87 = vunpack.c.l.b16 %v34
    %v88 = vunpack.c.h.b16 %v34
    %v89 = vpack.c.b16 %v59, %v57
    %v90 = vpack.c.b16 %v60, %v58
    %v91 = vpack.c.b16 %v63, %v61
    %v92 = vpack.c.b16 %v64, %v62
    %v93 = vpack.c.b16 %v67, %v65
    %v94 = vpack.c.b16 %v68, %v66
    %v95 = vpack.c.b16 %v71, %v69
    %v96 = vpack.c.b16 %v72, %v70
    %v97 = vpack.c.b16 %v75, %v73
    %v98 = vpack.c.b16 %v76, %v74
    %v99 = vpack.c.b16 %v79, %v77
    %v100 = vpack.c.b16 %v80, %v78
    %v101 = vpack.c.b16 %v83, %v81
    %v102 = vpack.c.b16 %v84, %v82
    %v103 = vpack.c.b16 %v87, %v85
    %v104 = vpack.c.b16 %v88, %v86
    %121 = vmatpush.bf16.msra.mxu0 %v103
    %122 = vmatpush.bf16.msra.mxu0 %v101
    %123 = vmatpush.bf16.msra.mxu0 %v99
    %124 = vmatpush.bf16.msra.mxu0 %v97
    %125 = vmatpush.bf16.msra.mxu0 %v95
    %126 = vmatpush.bf16.msra.mxu0 %v93
    %127 = vmatpush.bf16.msra.mxu0 %v91
    %128 = vmatpush.bf16.msra.mxu0 %v89
    %129 = vmatmul.bf16.gmra.mxu0 %v18
    %v130 = vpop.f32.mrf.mxu0
    %v131 = vadd.f32 %v37, %v130
    %v132 = vpop.f32.mrf.mxu0
    %133 = vdwg.mxu0
    %134 = vmatpush.bf16.msra.mxu0 %v104
    %135 = vmatpush.bf16.msra.mxu0 %v102
    %136 = vmatpush.bf16.msra.mxu0 %v100
    %137 = vmatpush.bf16.msra.mxu0 %v98
    %138 = vmatpush.bf16.msra.mxu0 %v96
    %139 = vmatpush.bf16.msra.mxu0 %v94
    %140 = vmatpush.bf16.msra.mxu0 %v92
    %141 = vmatpush.bf16.msra.mxu0 %v90
    %142 = vmatmul.bf16.gmra.mxu0 %v18
    %v143 = vpop.f32.mrf.mxu0
    %v144 = vadd.f32 %v38, %v143
    %v145 = vpop.f32.mrf.mxu0
    %146 = vdwg.mxu0
    %v147 = vmax.f32 %v131, 0.0
    %v148 = vpack.c.bf16 %v147, %v147
    %v149 = vld [vmem:[%s3] sm:$0xf]
    %v150 = vld [vmem:[%s3 + $0x4] sm:$0xf]
    %v151 = vld [vmem:[%s3 + $0x8] sm:$0xf]
    %v152 = vld [vmem:[%s3 + $0xc] sm:$0xf]
    %v153 = vld [vmem:[%s3 + $0x10] sm:$0xf]
    %v154 = vld [vmem:[%s3 + $0x14] sm:$0xf]
    %v155 = vld [vmem:[%s3 + $0x18] sm:$0xf]
    %v156 = vld [vmem:[%s3 + $0x1c] sm:$0xf]
    %v157 = vld [vmem:[%s3 + $0x20] sm:$0xf]
    %v158 = vld [vmem:[%s3 + $0x24] sm:$0xf]
    %v159 = vld [vmem:[%s3 + $0x28] sm:$0xf]
    %v160 = vld [vmem:[%s3 + $0x2c] sm:$0xf]
    %v161 = vld [vmem:[%s3 + $0x30] sm:$0xf]
    %v162 = vld [vmem:[%s3 + $0x34] sm:$0xf]
    %v163 = vld [vmem:[%s3 + $0x38] sm:$0xf]
    %v164 = vld [vmem:[%s3 + $0x3c] sm:$0xf]
    %v181 = vunpack.c.l.b16 %v149
    %v182 = vunpack.c.l.b16 %v150
    %v183 = vunpack.c.l.b16 %v151
    %v184 = vunpack.c.l.b16 %v152
    %v185 = vunpack.c.l.b16 %v153
    %v186 = vunpack.c.l.b16 %v154
    %v187 = vunpack.c.l.b16 %v155
    %v188 = vunpack.c.l.b16 %v156
    %v189 = vunpack.c.l.b16 %v157
    %v190 = vunpack.c.l.b16 %v158
    %v191 = vunpack.c.l.b16 %v159
    %v192 = vunpack.c.l.b16 %v160
    %v193 = vunpack.c.l.b16 %v161
    %v194 = vunpack.c.l.b16 %v162
    %v195 = vunpack.c.l.b16 %v163
    %v196 = vunpack.c.l.b16 %v164
    %v197 = vpack.c.b16 %v182, %v181
    %v198 = vpack.c.b16 %v184, %v183
    %v199 = vpack.c.b16 %v186, %v185
    %v200 = vpack.c.b16 %v188, %v187
    %v201 = vpack.c.b16 %v190, %v189
    %v202 = vpack.c.b16 %v192, %v191
    %v203 = vpack.c.b16 %v194, %v193
    %v204 = vpack.c.b16 %v196, %v195
    %213 = vmatpush.bf16.msra.mxu0 %v204
    %214 = vmatpush.bf16.msra.mxu0 %v203
    %215 = vmatpush.bf16.msra.mxu0 %v202
    %216 = vmatpush.bf16.msra.mxu0 %v201
    %217 = vmatpush.bf16.msra.mxu0 %v200
    %218 = vmatpush.bf16.msra.mxu0 %v199
    %219 = vmatpush.bf16.msra.mxu0 %v198
    %220 = vmatpush.bf16.msra.mxu0 %v197
    %221 = vmatmul.bf16.gmra.mxu0 %v148
    %v222 = vpop.f32.mrf.mxu0
    %v223 = vadd.f32 0.0, %v222
    %v224 = vpop.f32.mrf.mxu0
    %225 = vdwg.mxu0
    %v226 = vadd.f32 %v144, %v223
    %v227 = vmax.f32 %v226, 0.0
    %228 = vst [vmem:[#allocation2] sm:$0xff] %v227
    // Predicated region
    $region18: #{_residual_block_impl.1} parent=1 // pred_check
      _
    $region19: #{_residual_block_impl.1} parent=1 // pred_check_branch
      %230 = sbr.rel (0) target = $region21
    $region20: #{_residual_block_impl.1} parent=1 // pred_region
      %232 = vsyncadd [#allocation3], 0
      %s234 = sshll.u32 [#allocation2], 4
      %s235 = int_to_ptr.vmem [resolvable:$true] %s234
      %s236 = sshll.u32 %s4, 4
      %s237 = int_to_ptr.hbm [resolvable:$true] %s236
      %239 = dma.vmem_to_hbm [thread:$0]  %s235, 128, %s237, [#allocation3]
    $region21: #{_residual_block_impl.1} parent=1 // pred_fallthru
      _
    // Predicated region
    $region22: #{_residual_block_impl.1} parent=1 // pred_check
      _
    $region23: #{_residual_block_impl.1} parent=1 // pred_check_branch
      %241 = sbr.rel (0) target = $region25
    $region24: #{_residual_block_impl.1} parent=1 // pred_region
      %243 = dma.done [#allocation3], 128
    $region25: #{_residual_block_impl.1} parent=1 // pred_fallthru
      _
    %244 = vsyncpa [#allocation3], 1

</llo_original>
